<compile_context>
chip_gen: v6e
topology: v6e:2x2x1
jax: 0.10.0
libtpu: 0.0.40
codegen_flags: <defaults>
</compile_context>

<pallas_src>
import functools

import jax
import jax.numpy as jnp
from jax.experimental import pallas as pl
from jax.experimental.pallas import tpu as pltpu

NUM_FEATURES = 4    # dataset.feature.shape[-1]  (>=4: xyz position + scalar field)
NUM_TARGETS = 3     # dataset.target.shape[-1]
NUM_HIDDEN = 32
NUM_LAYERS = 3      # -> NUM_LAYERS - 1 processor iterations

LANE = 128          # lane-dense padding for the feature/hidden axis
SUBLANE = 8         # sublane granularity for the node axis
MAX_ROW_TILE = 512  # rows per grid step for large graphs


def _round_up(n, m):
    return ((n + m - 1) // m) * m


# ------------------------------ fused Pallas kernel ------------------------------

def gn_tree_kernel(x_ref, w1, b1, w2, b2, w3, b3, w4, b4, out_ref, *, res_scale):
    """Fused GN_tree forward on one (TN, 128) tile of nodes.

    Processor loop: with node_model (sim_net) absent, MetaLayer returns x
    unchanged, so x <- x + relu(x) repeated k times == where(x>0, x*2**k, x).
    NOTE: this algebraic collapse must be reverted if a node model is injected.
    Decoder: Linear->ReLU x3 then Linear, on lane-padded (128-wide) weights so
    matmuls are full 128x128 MXU tiles and all stores are unmasked.
    Padded lanes/rows are zero in x and in the weight rows / bias lanes, so they
    contribute nothing to the real output columns.
    """
    x = x_ref[...]
    x = jnp.where(x > 0.0, x * res_scale, x)   # collapsed residual-ReLU loop
    h = jnp.maximum(jnp.dot(x, w1[...], preferred_element_type=jnp.float32) + b1[...], 0.0)
    h = jnp.maximum(jnp.dot(h, w2[...], preferred_element_type=jnp.float32) + b2[...], 0.0)
    h = jnp.maximum(jnp.dot(h, w3[...], preferred_element_type=jnp.float32) + b3[...], 0.0)
    out_ref[...] = jnp.dot(h, w4[...], preferred_element_type=jnp.float32) + b4[...]


# ------------------------------ wrappers ------------------------------

def init_decoder_params(key):
    """nn.Linear-style U(-1/sqrt(fan_in), 1/sqrt(fan_in)) init, padded ONCE to
    lane-dense (128,128)/(1,128) tiles (zeros elsewhere)."""
    sizes = [(NUM_FEATURES, NUM_HIDDEN),
             (NUM_HIDDEN, NUM_HIDDEN),
             (NUM_HIDDEN, NUM_HIDDEN),
             (NUM_HIDDEN, NUM_TARGETS)]
    params = []
    for fan_in, fan_out in sizes:
        key, wk, bk = jax.random.split(key, 3)
        bound = 1.0 / float(fan_in) ** 0.5
        w = jax.random.uniform(wk, (fan_in, fan_out), jnp.float32, -bound, bound)
        b = jax.random.uniform(bk, (fan_out,), jnp.float32, -bound, bound)
        w_p = jnp.zeros((LANE, LANE), jnp.float32).at[:fan_in, :fan_out].set(w)
        b_p = jnp.zeros((1, LANE), jnp.float32).at[0, :fan_out].set(b)
        params += [w_p, b_p]
    return tuple(params)


@functools.partial(jax.jit, static_argnames=("num_layers",))
def gn_tree_forward(x, edge_index, params, num_layers=NUM_LAYERS):
    """GN_tree.forward: (num_layers-1) residual steps + 4-layer decoder, fused."""
    # TODO(synk): node_model (`sim_net`) is injected externally and not defined in
    # the source module; with node_model=None the MetaLayer edge output is never
    # consumed, so the edge gather + AssemblyModel path is dead and removed here.
    del edge_index

    n, f = x.shape
    # Pad nodes to full sublanes and a whole number of row tiles; features to full lanes.
    n_pad = _round_up(max(n, SUBLANE), SUBLANE)
    tile_n = min(MAX_ROW_TILE, n_pad)
    n_pad = _round_up(n_pad, tile_n)
    x_p = jnp.zeros((n_pad, LANE), jnp.float32).at[:n, :f].set(x.astype(jnp.float32))

    res_scale = float(2 ** (num_layers - 1))
    kernel = functools.partial(gn_tree_kernel, res_scale=res_scale)

    row_spec = pl.BlockSpec((tile_n, LANE), lambda i: (i, 0))
    w_spec = pl.BlockSpec((LANE, LANE), lambda i: (0, 0))
    b_spec = pl.BlockSpec((1, LANE), lambda i: (0, 0))

    out = pl.pallas_call(
        kernel,
        out_shape=jax.ShapeDtypeStruct((n_pad, LANE), jnp.float32),
        grid_spec=pltpu.PrefetchScalarGridSpec(
            num_scalar_prefetch=0,
            grid=(n_pad // tile_n,),
            in_specs=[row_spec] + [w_spec, b_spec] * 4,
            out_specs=row_spec,
        ),
        compiler_params=pltpu.CompilerParams(
            dimension_semantics=("parallel",)),   # shards node tiles across TCs (v7x)
    )(x_p, *params)

    return out[:n, :NUM_TARGETS]


if __name__ == "__main__":
    key = jax.random.PRNGKey(0)
    kx, kp = jax.random.split(key)

    n_nodes = 16
    x = jax.random.normal(kx, (n_nodes, NUM_FEATURES), dtype=jnp.float32)

    # Tree connectivity: node i (i>0) connects to parent (i-1)//2.  Kept to mirror
    # the reference API; unused by the forward pass (edge output is discarded
    # when node_model is None).
    children = jnp.arange(1, n_nodes, dtype=jnp.int32)
    parents = (children - 1) // 2
    edge_index = jnp.stack([parents, children], axis=0)  # (2, 15)

    params = init_decoder_params(kp)

    out = gn_tree_forward(x, edge_index, params)
    out = jax.block_until_ready(out)
    assert out.shape == (n_nodes, NUM_TARGETS)
    assert out.dtype == jnp.float32
    print("KERNEL_OK")
</pallas_src>

<mosaic_0001>
module attributes {stable_mosaic.version = 11 : i64} {
  func.func @gn_tree_kernel(%arg0: i32, %arg1: memref<16x128xf32, #tpu.memory_space<vmem>>, %arg2: memref<128x128xf32, #tpu.memory_space<vmem>>, %arg3: memref<1x128xf32, #tpu.memory_space<vmem>>, %arg4: memref<128x128xf32, #tpu.memory_space<vmem>>, %arg5: memref<1x128xf32, #tpu.memory_space<vmem>>, %arg6: memref<128x128xf32, #tpu.memory_space<vmem>>, %arg7: memref<1x128xf32, #tpu.memory_space<vmem>>, %arg8: memref<128x128xf32, #tpu.memory_space<vmem>>, %arg9: memref<1x128xf32, #tpu.memory_space<vmem>>, %arg10: memref<16x128xf32, #tpu.memory_space<vmem>>) attributes {dimension_semantics = [#tpu.dimension_semantics<parallel>], iteration_bounds = array<i64: 1>, scalar_prefetch = 0 : i64, scratch_operands = 0 : i64, tpu.core_type = #tpu.core_type<tc>, window_params = [{transform_indices = @transform_0, window_bounds = array<i64: 16, 128>}, {pipeline_mode = #tpu.pipeline_mode<synchronous>, transform_indices = @transform_1, window_bounds = array<i64: 128, 128>}, {pipeline_mode = #tpu.pipeline_mode<synchronous>, transform_indices = @transform_2, window_bounds = array<i64: 1, 128>}, {pipeline_mode = #tpu.pipeline_mode<synchronous>, transform_indices = @transform_3, window_bounds = array<i64: 128, 128>}, {pipeline_mode = #tpu.pipeline_mode<synchronous>, transform_indices = @transform_4, window_bounds = array<i64: 1, 128>}, {pipeline_mode = #tpu.pipeline_mode<synchronous>, transform_indices = @transform_5, window_bounds = array<i64: 128, 128>}, {pipeline_mode = #tpu.pipeline_mode<synchronous>, transform_indices = @transform_6, window_bounds = array<i64: 1, 128>}, {pipeline_mode = #tpu.pipeline_mode<synchronous>, transform_indices = @transform_7, window_bounds = array<i64: 128, 128>}, {pipeline_mode = #tpu.pipeline_mode<synchronous>, transform_indices = @transform_8, window_bounds = array<i64: 1, 128>}, {transform_indices = @transform_9, window_bounds = array<i64: 16, 128>}]} {
    %c0 = arith.constant 0 : index
    %c0_0 = arith.constant 0 : index
    %0 = vector.load %arg1[%c0, %c0_0] : memref<16x128xf32, #tpu.memory_space<vmem>>, vector<16x128xf32>
    %cst = arith.constant 0.000000e+00 : f32
    %1 = vector.broadcast %cst : f32 to vector<16x128xf32>
    %2 = arith.cmpf ogt, %0, %1 : vector<16x128xf32>
    %cst_1 = arith.constant 4.000000e+00 : f32
    %3 = vector.broadcast %cst_1 : f32 to vector<16x128xf32>
    %4 = arith.mulf %0, %3 : vector<16x128xf32>
    %5 = arith.select %2, %4, %0 : vector<16x128xi1>, vector<16x128xf32>
    %c0_2 = arith.constant 0 : index
    %c0_3 = arith.constant 0 : index
    %6 = vector.load %arg2[%c0_2, %c0_3] : memref<128x128xf32, #tpu.memory_space<vmem>>, vector<128x128xf32>
    %cst_4 = arith.constant dense<0.000000e+00> : vector<16x128xf32>
    %7 = tpu.matmul %5, %6, %cst_4 {dimension_numbers = #tpu.dot_dimension_numbers<[1], [0], [0], [1], [0, 0, 1, 1], [], []>} : vector<16x128xf32>, vector<128x128xf32>, vector<16x128xf32> -> vector<16x128xf32>
    %c0_5 = arith.constant 0 : index
    %c0_6 = arith.constant 0 : index
    %8 = vector.load %arg3[%c0_5, %c0_6] : memref<1x128xf32, #tpu.memory_space<vmem>>, vector<1x128xf32>
    %9 = vector.broadcast %8 : vector<1x128xf32> to vector<16x128xf32>
    %10 = arith.addf %7, %9 : vector<16x128xf32>
    %cst_7 = arith.constant 0.000000e+00 : f32
    %11 = vector.broadcast %cst_7 : f32 to vector<16x128xf32>
    %12 = arith.maximumf %10, %11 : vector<16x128xf32>
    %c0_8 = arith.constant 0 : index
    %c0_9 = arith.constant 0 : index
    %13 = vector.load %arg4[%c0_8, %c0_9] : memref<128x128xf32, #tpu.memory_space<vmem>>, vector<128x128xf32>
    %cst_10 = arith.constant dense<0.000000e+00> : vector<16x128xf32>
    %14 = tpu.matmul %12, %13, %cst_10 {dimension_numbers = #tpu.dot_dimension_numbers<[1], [0], [0], [1], [0, 0, 1, 1], [], []>} : vector<16x128xf32>, vector<128x128xf32>, vector<16x128xf32> -> vector<16x128xf32>
    %c0_11 = arith.constant 0 : index
    %c0_12 = arith.constant 0 : index
    %15 = vector.load %arg5[%c0_11, %c0_12] : memref<1x128xf32, #tpu.memory_space<vmem>>, vector<1x128xf32>
    %16 = vector.broadcast %15 : vector<1x128xf32> to vector<16x128xf32>
    %17 = arith.addf %14, %16 : vector<16x128xf32>
    %cst_13 = arith.constant 0.000000e+00 : f32
    %18 = vector.broadcast %cst_13 : f32 to vector<16x128xf32>
    %19 = arith.maximumf %17, %18 : vector<16x128xf32>
    %c0_14 = arith.constant 0 : index
    %c0_15 = arith.constant 0 : index
    %20 = vector.load %arg6[%c0_14, %c0_15] : memref<128x128xf32, #tpu.memory_space<vmem>>, vector<128x128xf32>
    %cst_16 = arith.constant dense<0.000000e+00> : vector<16x128xf32>
    %21 = tpu.matmul %19, %20, %cst_16 {dimension_numbers = #tpu.dot_dimension_numbers<[1], [0], [0], [1], [0, 0, 1, 1], [], []>} : vector<16x128xf32>, vector<128x128xf32>, vector<16x128xf32> -> vector<16x128xf32>
    %c0_17 = arith.constant 0 : index
    %c0_18 = arith.constant 0 : index
    %22 = vector.load %arg7[%c0_17, %c0_18] : memref<1x128xf32, #tpu.memory_space<vmem>>, vector<1x128xf32>
    %23 = vector.broadcast %22 : vector<1x128xf32> to vector<16x128xf32>
    %24 = arith.addf %21, %23 : vector<16x128xf32>
    %cst_19 = arith.constant 0.000000e+00 : f32
    %25 = vector.broadcast %cst_19 : f32 to vector<16x128xf32>
    %26 = arith.maximumf %24, %25 : vector<16x128xf32>
    %c0_20 = arith.constant 0 : index
    %c0_21 = arith.constant 0 : index
    %27 = vector.load %arg8[%c0_20, %c0_21] : memref<128x128xf32, #tpu.memory_space<vmem>>, vector<128x128xf32>
    %cst_22 = arith.constant dense<0.000000e+00> : vector<16x128xf32>
    %28 = tpu.matmul %26, %27, %cst_22 {dimension_numbers = #tpu.dot_dimension_numbers<[1], [0], [0], [1], [0, 0, 1, 1], [], []>} : vector<16x128xf32>, vector<128x128xf32>, vector<16x128xf32> -> vector<16x128xf32>
    %c0_23 = arith.constant 0 : index
    %c0_24 = arith.constant 0 : index
    %29 = vector.load %arg9[%c0_23, %c0_24] : memref<1x128xf32, #tpu.memory_space<vmem>>, vector<1x128xf32>
    %30 = vector.broadcast %29 : vector<1x128xf32> to vector<16x128xf32>
    %31 = arith.addf %28, %30 : vector<16x128xf32>
    %c0_25 = arith.constant 0 : index
    %c0_26 = arith.constant 0 : index
    %32 = vector.load %arg10[%c0_25, %c0_26] : memref<16x128xf32, #tpu.memory_space<vmem>>, vector<16x128xf32>
    tpu.vector_store %arg10[%c0_25, %c0_26], %31 {strides = array<i32>} : memref<16x128xf32, #tpu.memory_space<vmem>>, vector<16x128xf32>,
    return
  }
  func.func @transform_0(%arg0: i32) -> (i32, i32) {
    %c0_i32 = arith.constant 0 : i32
    %c0_i32_0 = arith.constant 0 : i32
    return %arg0, %c0_i32 : i32, i32
  }
  func.func @transform_1(%arg0: i32) -> (i32, i32) {
    %c0_i32 = arith.constant 0 : i32
    %c0_i32_0 = arith.constant 0 : i32
    %c0_i32_1 = arith.constant 0 : i32
    return %c0_i32, %c0_i32_0 : i32, i32
  }
  func.func @transform_2(%arg0: i32) -> (i32, i32) {
    %c0_i32 = arith.constant 0 : i32
    %c0_i32_0 = arith.constant 0 : i32
    %c0_i32_1 = arith.constant 0 : i32
    return %c0_i32, %c0_i32_0 : i32, i32
  }
  func.func @transform_3(%arg0: i32) -> (i32, i32) {
    %c0_i32 = arith.constant 0 : i32
    %c0_i32_0 = arith.constant 0 : i32
    %c0_i32_1 = arith.constant 0 : i32
    return %c0_i32, %c0_i32_0 : i32, i32
  }
  func.func @transform_4(%arg0: i32) -> (i32, i32) {
    %c0_i32 = arith.constant 0 : i32
    %c0_i32_0 = arith.constant 0 : i32
    %c0_i32_1 = arith.constant 0 : i32
    return %c0_i32, %c0_i32_0 : i32, i32
  }
  func.func @transform_5(%arg0: i32) -> (i32, i32) {
    %c0_i32 = arith.constant 0 : i32
    %c0_i32_0 = arith.constant 0 : i32
    %c0_i32_1 = arith.constant 0 : i32
    return %c0_i32, %c0_i32_0 : i32, i32
  }
  func.func @transform_6(%arg0: i32) -> (i32, i32) {
    %c0_i32 = arith.constant 0 : i32
    %c0_i32_0 = arith.constant 0 : i32
    %c0_i32_1 = arith.constant 0 : i32
    return %c0_i32, %c0_i32_0 : i32, i32
  }
  func.func @transform_7(%arg0: i32) -> (i32, i32) {
    %c0_i32 = arith.constant 0 : i32
    %c0_i32_0 = arith.constant 0 : i32
    %c0_i32_1 = arith.constant 0 : i32
    return %c0_i32, %c0_i32_0 : i32, i32
  }
  func.func @transform_8(%arg0: i32) -> (i32, i32) {
    %c0_i32 = arith.constant 0 : i32
    %c0_i32_0 = arith.constant 0 : i32
    %c0_i32_1 = arith.constant 0 : i32
    return %c0_i32, %c0_i32_0 : i32, i32
  }
  func.func @transform_9(%arg0: i32) -> (i32, i32) {
    %c0_i32 = arith.constant 0 : i32
    %c0_i32_0 = arith.constant 0 : i32
    return %arg0, %c0_i32 : i32, i32
  }
}

</mosaic_0001>

<llo_original>
// kernel: gn_tree_forward.1
$region0: #{gn_tree_forward.1}
  #allocation0 [shape = 'u32[]', space=smem, size = 0x4, offset = 0x4, fixed_abs, tag = 'smem constant byte address 0x4 - core index']
  #allocation1 [shape = 'u32[144,128]{1,0:T(1,128)}', space=vmem, size = 0x12000, scoped, tag = 'internal scratch']
  %s0 = inlined_call_operand.vmem [shape: f32[16,128], index: 0, kind: input, shape index: {}]
  %s1 = inlined_call_operand.hbm [shape: f32[128,128], index: 1, kind: input, shape index: {}]
  %s2 = inlined_call_operand.vmem [shape: f32[1,128], index: 2, kind: input, shape index: {}]
  %s3 = inlined_call_operand.hbm [shape: f32[128,128], index: 3, kind: input, shape index: {}]
  %s4 = inlined_call_operand.vmem [shape: f32[1,128], index: 4, kind: input, shape index: {}]
  %s5 = inlined_call_operand.hbm [shape: f32[128,128], index: 5, kind: input, shape index: {}]
  %s6 = inlined_call_operand.vmem [shape: f32[1,128], index: 6, kind: input, shape index: {}]
  %s7 = inlined_call_operand.hbm [shape: f32[128,128], index: 7, kind: input, shape index: {}]
  %s8 = inlined_call_operand.vmem [shape: f32[1,128], index: 8, kind: input, shape index: {}]
  %s9 = inlined_call_operand.vmem [shape: f32[16,128], index: 9, kind: output, shape index: {}]
  %s10 = sld [smem:[#allocation0]]
  $region62: #{gn_tree_forward.1} parent=0
    _
  %s12 = ssub.s32 1, %s10
  %s13 = scalar_select 0, %s12, %s10
  $region1: #{gn_tree_forward.1} parent=0
    #allocation2 [shape = 'u8[65536]{0}', space=vmem, size = 0x10000, scoped, tag = 'input window, operand 1, single buffered']
    #allocation3 [shape = 's32[1]{0}', space=sflag, size = 0x4, scoped, tag = 'scoped memory for gn_tree_forward.1']
    #allocation4 [shape = 'u8[65536]{0}', space=vmem, size = 0x10000, scoped, tag = 'input window, operand 3, single buffered']
    #allocation5 [shape = 's32[1]{0}', space=sflag, size = 0x4, scoped, tag = 'scoped memory for gn_tree_forward.1']
    #allocation6 [shape = 'u8[65536]{0}', space=vmem, size = 0x10000, scoped, tag = 'input window, operand 5, single buffered']
    #allocation7 [shape = 'u8[65536]{0}', space=vmem, size = 0x10000, scoped, tag = 'input window, operand 7, single buffered']
    #allocation8 [shape = 's32[1]{0}', space=sflag, size = 0x4, scoped, tag = 'scoped memory for gn_tree_forward.1']
    %14 = vsyncpa [#allocation3], 0
    %15 = vsyncpa [#allocation5], 0
    %16 = vsyncpa [#allocation8], 0
    // Predicated region
    $region2: #{gn_tree_forward.1} parent=1 // pred_check
      _
    $region3: #{gn_tree_forward.1} parent=1 // pred_check_branch
      %18 = sbr.rel (0) target = $region5
    $region4: #{gn_tree_forward.1} parent=1 // pred_region
      _
    $region5: #{gn_tree_forward.1} parent=1 // pred_fallthru
      _
    // Predicated region
    $region6: #{gn_tree_forward.1} parent=1 // pred_check
      _
    $region7: #{gn_tree_forward.1} parent=1 // pred_check_branch
      %20 = sbr.rel (0) target = $region9
    $region8: #{gn_tree_forward.1} parent=1 // pred_region
      %s22 = ssub.s32 2048, 2048
      %23 = vsyncadd [#allocation3], %s22
      %s24 = sshll.u32 [#allocation2], 4
      %s25 = int_to_ptr.vmem [resolvable:$true] %s24
      %30 = dma.hbm_to_vmem [thread:$0]  %s1, 2048, %s25, [#allocation3], 128, 128, 8
    $region9: #{gn_tree_forward.1} parent=1 // pred_fallthru
      _
    // Predicated region
    $region10: #{gn_tree_forward.1} parent=1 // pred_check
      _
    $region11: #{gn_tree_forward.1} parent=1 // pred_check_branch
      %32 = sbr.rel (0) target = $region13
    $region12: #{gn_tree_forward.1} parent=1 // pred_region
      _
    $region13: #{gn_tree_forward.1} parent=1 // pred_fallthru
      _
    // Predicated region
    $region14: #{gn_tree_forward.1} parent=1 // pred_check
      _
    $region15: #{gn_tree_forward.1} parent=1 // pred_check_branch
      %34 = sbr.rel (0) target = $region17
    $region16: #{gn_tree_forward.1} parent=1 // pred_region
      %s36 = ssub.s32 2048, 2048
      %37 = vsyncadd [#allocation5], %s36
      %s38 = sshll.u32 [#allocation4], 4
      %s39 = int_to_ptr.vmem [resolvable:$true] %s38
      %44 = dma.hbm_to_vmem [thread:$0]  %s3, 2048, %s39, [#allocation5], 128, 128, 8
    $region17: #{gn_tree_forward.1} parent=1 // pred_fallthru
      _
    // Predicated region
    $region18: #{gn_tree_forward.1} parent=1 // pred_check
      _
    $region19: #{gn_tree_forward.1} parent=1 // pred_check_branch
      %46 = sbr.rel (0) target = $region21
    $region20: #{gn_tree_forward.1} parent=1 // pred_region
      _
    $region21: #{gn_tree_forward.1} parent=1 // pred_fallthru
      _
    // Predicated region
    $region22: #{gn_tree_forward.1} parent=1 // pred_check
      _
    $region23: #{gn_tree_forward.1} parent=1 // pred_check_branch
      %48 = sbr.rel (0) target = $region25
    $region24: #{gn_tree_forward.1} parent=1 // pred_region
      %s50 = ssub.s32 2048, 2048
      %51 = vsyncadd [#allocation5], %s50
      %s52 = sshll.u32 [#allocation6], 4
      %s53 = int_to_ptr.vmem [resolvable:$true] %s52
      %58 = dma.hbm_to_vmem [thread:$0]  %s5, 2048, %s53, [#allocation5], 128, 128, 8
    $region25: #{gn_tree_forward.1} parent=1 // pred_fallthru
      _
    // Predicated region
    $region26: #{gn_tree_forward.1} parent=1 // pred_check
      _
    $region27: #{gn_tree_forward.1} parent=1 // pred_check_branch
      %60 = sbr.rel (0) target = $region29
    $region28: #{gn_tree_forward.1} parent=1 // pred_region
      _
    $region29: #{gn_tree_forward.1} parent=1 // pred_fallthru
      _
    // Predicated region
    $region30: #{gn_tree_forward.1} parent=1 // pred_check
      _
    $region31: #{gn_tree_forward.1} parent=1 // pred_check_branch
      %62 = sbr.rel (0) target = $region33
    $region32: #{gn_tree_forward.1} parent=1 // pred_region
      %s64 = ssub.s32 2048, 2048
      %65 = vsyncadd [#allocation8], %s64
      %s66 = sshll.u32 [#allocation7], 4
      %s67 = int_to_ptr.vmem [resolvable:$true] %s66
      %72 = dma.hbm_to_vmem [thread:$0]  %s7, 2048, %s67, [#allocation8], 128, 128, 8
    $region33: #{gn_tree_forward.1} parent=1 // pred_fallthru
      _
    // Predicated region
    $region34: #{gn_tree_forward.1} parent=1 // pred_check
      _
    $region35: #{gn_tree_forward.1} parent=1 // pred_check_branch
      %74 = sbr.rel (0) target = $region37
    $region36: #{gn_tree_forward.1} parent=1 // pred_region
      _
    $region37: #{gn_tree_forward.1} parent=1 // pred_fallthru
      _
    // Predicated region
    $region38: #{gn_tree_forward.1} parent=1 // pred_check
      _
    $region39: #{gn_tree_forward.1} parent=1 // pred_check_branch
      %76 = sbr.rel (0) target = $region41
    $region40: #{gn_tree_forward.1} parent=1 // pred_region
      %77 = dma.done [#allocation3], 2048
    $region41: #{gn_tree_forward.1} parent=1 // pred_fallthru
      _
    // Predicated region
    $region42: #{gn_tree_forward.1} parent=1 // pred_check
      _
    $region43: #{gn_tree_forward.1} parent=1 // pred_check_branch
      %79 = sbr.rel (0) target = $region45
    $region44: #{gn_tree_forward.1} parent=1 // pred_region
      %80 = dma.done [#allocation5], 2048
    $region45: #{gn_tree_forward.1} parent=1 // pred_fallthru
      _
    // Predicated region
    $region46: #{gn_tree_forward.1} parent=1 // pred_check
      _
    $region47: #{gn_tree_forward.1} parent=1 // pred_check_branch
      %82 = sbr.rel (0) target = $region49
    $region48: #{gn_tree_forward.1} parent=1 // pred_region
      %83 = dma.done [#allocation5], 2048
    $region49: #{gn_tree_forward.1} parent=1 // pred_fallthru
      _
    // Predicated region
    $region50: #{gn_tree_forward.1} parent=1 // pred_check
      _
    $region51: #{gn_tree_forward.1} parent=1 // pred_check_branch
      %85 = sbr.rel (0) target = $region53
    $region52: #{gn_tree_forward.1} parent=1 // pred_region
      %86 = dma.done [#allocation8], 2048
    $region53: #{gn_tree_forward.1} parent=1 // pred_fallthru
      _
    %v87 = vld [vmem:[%s0] sm:$0xff]
    %v88 = vld [vmem:[%s0 + $0x8] sm:$0xff]
    %vm89 = vcmp.gt.f32.partialorder %v87, 0.0
    %vm90 = vcmp.gt.f32.partialorder %v88, 0.0
    %v91 = vmul.f32 %v87, 4.0
    %v92 = vmul.f32 %v88, 4.0
    %v93 = vsel %vm89, %v91, %v87
    %v94 = vsel %vm90, %v92, %v88
    %v95 = vld [vmem:[#allocation2] sm:$0xff]
    %v96 = vld [vmem:[#allocation2 + $0x8] sm:$0xff]
    %v97 = vld [vmem:[#allocation2 + $0x10] sm:$0xff]
    %v98 = vld [vmem:[#allocation2 + $0x18] sm:$0xff]
    %v99 = vld [vmem:[#allocation2 + $0x20] sm:$0xff]
    %v100 = vld [vmem:[#allocation2 + $0x28] sm:$0xff]
    %v101 = vld [vmem:[#allocation2 + $0x30] sm:$0xff]
    %v102 = vld [vmem:[#allocation2 + $0x38] sm:$0xff]
    %v103 = vld [vmem:[#allocation2 + $0x40] sm:$0xff]
    %v104 = vld [vmem:[#allocation2 + $0x48] sm:$0xff]
    %v105 = vld [vmem:[#allocation2 + $0x50] sm:$0xff]
    %v106 = vld [vmem:[#allocation2 + $0x58] sm:$0xff]
    %v107 = vld [vmem:[#allocation2 + $0x60] sm:$0xff]
    %v108 = vld [vmem:[#allocation2 + $0x68] sm:$0xff]
    %v109 = vld [vmem:[#allocation2 + $0x70] sm:$0xff]
    %v110 = vld [vmem:[#allocation2 + $0x78] sm:$0xff]
    %v111 = vld [vmem:[%s2] sm:$0x1]
    %v113 = vlaneseq
    %v114 = vshrl.u32 %v113, 7
    %v115 = vsub.s32 0, %v114
    %v116 = vrot.slane %v111, %v115
    %118 = vmatprep.subr.mxu0 0.0
    %119 = vmatpush1.msra.mxu0 %v110
    %120 = vmatprep.subr.mxu0 0.0
    %121 = vmatpush1.msra.mxu0 %v109
    %122 = vmatprep.subr.mxu0 0.0
    %123 = vmatpush1.msra.mxu0 %v108
    %124 = vmatprep.subr.mxu0 0.0
    %125 = vmatpush1.msra.mxu0 %v107
    %126 = vmatprep.subr.mxu0 0.0
    %127 = vmatpush1.msra.mxu0 %v106
    %128 = vmatprep.subr.mxu0 0.0
    %129 = vmatpush1.msra.mxu0 %v105
    %130 = vmatprep.subr.mxu0 0.0
    %131 = vmatpush1.msra.mxu0 %v104
    %132 = vmatprep.subr.mxu0 0.0
    %133 = vmatpush1.msra.mxu0 %v103
    %134 = vmatprep.subr.mxu0 0.0
    %135 = vmatpush1.msra.mxu0 %v102
    %136 = vmatprep.subr.mxu0 0.0
    %137 = vmatpush1.msra.mxu0 %v101
    %138 = vmatprep.subr.mxu0 0.0
    %139 = vmatpush1.msra.mxu0 %v100
    %140 = vmatprep.subr.mxu0 0.0
    %141 = vmatpush1.msra.mxu0 %v99
    %142 = vmatprep.subr.mxu0 0.0
    %143 = vmatpush1.msra.mxu0 %v98
    %144 = vmatprep.subr.mxu0 0.0
    %145 = vmatpush1.msra.mxu0 %v97
    %146 = vmatprep.subr.mxu0 0.0
    %147 = vmatpush1.msra.mxu0 %v96
    %148 = vmatprep.subr.mxu0 0.0
    %149 = vmatpush1.msra.mxu0 %v95
    %150 = vmatprep.subr.mxu0 0.0
    %151 = vmatpush2.msra.mxu0 0.0
    %152 = vmatprep.subr.mxu0 0.0
    %153 = vmatpush2.msra.mxu0 0.0
    %154 = vmatprep.subr.mxu0 0.0
    %155 = vmatpush2.msra.mxu0 0.0
    %156 = vmatprep.subr.mxu0 0.0
    %157 = vmatpush2.msra.mxu0 0.0
    %158 = vmatprep.subr.mxu0 0.0
    %159 = vmatpush2.msra.mxu0 0.0
    %160 = vmatprep.subr.mxu0 0.0
    %161 = vmatpush2.msra.mxu0 0.0
    %162 = vmatprep.subr.mxu0 0.0
    %163 = vmatpush2.msra.mxu0 0.0
    %164 = vmatprep.subr.mxu0 0.0
    %165 = vmatpush2.msra.mxu0 0.0
    %166 = vmatprep.subr.mxu0 0.0
    %167 = vmatpush2.msra.mxu0 0.0
    %168 = vmatprep.subr.mxu0 0.0
    %169 = vmatpush2.msra.mxu0 0.0
    %170 = vmatprep.subr.mxu0 0.0
    %171 = vmatpush2.msra.mxu0 0.0
    %172 = vmatprep.subr.mxu0 0.0
    %173 = vmatpush2.msra.mxu0 0.0
    %174 = vmatprep.subr.mxu0 0.0
    %175 = vmatpush2.msra.mxu0 0.0
    %176 = vmatprep.subr.mxu0 0.0
    %177 = vmatpush2.msra.mxu0 0.0
    %178 = vmatprep.subr.mxu0 0.0
    %179 = vmatpush2.msra.mxu0 0.0
    %180 = vmatprep.subr.mxu0 0.0
    %181 = vmatpush2.msra.mxu0 0.0
    %182 = vmatprep.mubr.f32.mxu0 0.0
    %183 = vmatmul.mubr.f32.gmra.mxu0 %v93
    %v184 = vpop.f32.mrf.mxu0
    %v185 = vadd.f32 %v116, %v184
    %v186 = vpop.f32.mrf.mxu0
    %187 = vmatprep.mubr.f32.mxu0 0.0
    %188 = vmatmul.mubr.f32.gmra.mxu0 %v94
    %v189 = vpop.f32.mrf.mxu0
    %v190 = vadd.f32 %v116, %v189
    %v191 = vpop.f32.mrf.mxu0
    %192 = vdwg.mxu0
    %v193 = vmax.f32 %v185, 0.0
    %v194 = vmax.f32 %v190, 0.0
    %v195 = vld [vmem:[#allocation4] sm:$0xff]
    %v196 = vld [vmem:[#allocation4 + $0x8] sm:$0xff]
    %v197 = vld [vmem:[#allocation4 + $0x10] sm:$0xff]
    %v198 = vld [vmem:[#allocation4 + $0x18] sm:$0xff]
    %v199 = vld [vmem:[#allocation4 + $0x20] sm:$0xff]
    %v200 = vld [vmem:[#allocation4 + $0x28] sm:$0xff]
    %v201 = vld [vmem:[#allocation4 + $0x30] sm:$0xff]
    %v202 = vld [vmem:[#allocation4 + $0x38] sm:$0xff]
    %v203 = vld [vmem:[#allocation4 + $0x40] sm:$0xff]
    %v204 = vld [vmem:[#allocation4 + $0x48] sm:$0xff]
    %v205 = vld [vmem:[#allocation4 + $0x50] sm:$0xff]
    %v206 = vld [vmem:[#allocation4 + $0x58] sm:$0xff]
    %v207 = vld [vmem:[#allocation4 + $0x60] sm:$0xff]
    %v208 = vld [vmem:[#allocation4 + $0x68] sm:$0xff]
    %v209 = vld [vmem:[#allocation4 + $0x70] sm:$0xff]
    %v210 = vld [vmem:[#allocation4 + $0x78] sm:$0xff]
    %v211 = vld [vmem:[%s4] sm:$0x1]
    %v213 = vlaneseq
    %v214 = vshrl.u32 %v213, 7
    %v215 = vsub.s32 0, %v214
    %v216 = vrot.slane %v211, %v215
    %218 = vmatprep.subr.mxu0 0.0
    %219 = vmatpush1.msra.mxu0 %v210
    %220 = vmatprep.subr.mxu0 0.0
    %221 = vmatpush1.msra.mxu0 %v209
    %222 = vmatprep.subr.mxu0 0.0
    %223 = vmatpush1.msra.mxu0 %v208
    %224 = vmatprep.subr.mxu0 0.0
    %225 = vmatpush1.msra.mxu0 %v207
    %226 = vmatprep.subr.mxu0 0.0
    %227 = vmatpush1.msra.mxu0 %v206
    %228 = vmatprep.subr.mxu0 0.0
    %229 = vmatpush1.msra.mxu0 %v205
    %230 = vmatprep.subr.mxu0 0.0
    %231 = vmatpush1.msra.mxu0 %v204
    %232 = vmatprep.subr.mxu0 0.0
    %233 = vmatpush1.msra.mxu0 %v203
    %234 = vmatprep.subr.mxu0 0.0
    %235 = vmatpush1.msra.mxu0 %v202
    %236 = vmatprep.subr.mxu0 0.0
    %237 = vmatpush1.msra.mxu0 %v201
    %238 = vmatprep.subr.mxu0 0.0
    %239 = vmatpush1.msra.mxu0 %v200
    %240 = vmatprep.subr.mxu0 0.0
    %241 = vmatpush1.msra.mxu0 %v199
    %242 = vmatprep.subr.mxu0 0.0
    %243 = vmatpush1.msra.mxu0 %v198
    %244 = vmatprep.subr.mxu0 0.0
    %245 = vmatpush1.msra.mxu0 %v197
    %246 = vmatprep.subr.mxu0 0.0
    %247 = vmatpush1.msra.mxu0 %v196
    %248 = vmatprep.subr.mxu0 0.0
    %249 = vmatpush1.msra.mxu0 %v195
    %250 = vmatprep.subr.mxu0 0.0
    %251 = vmatpush2.msra.mxu0 0.0
    %252 = vmatprep.subr.mxu0 0.0
    %253 = vmatpush2.msra.mxu0 0.0
    %254 = vmatprep.subr.mxu0 0.0
    %255 = vmatpush2.msra.mxu0 0.0
    %256 = vmatprep.subr.mxu0 0.0
    %257 = vmatpush2.msra.mxu0 0.0
    %258 = vmatprep.subr.mxu0 0.0
    %259 = vmatpush2.msra.mxu0 0.0
    %260 = vmatprep.subr.mxu0 0.0
    %261 = vmatpush2.msra.mxu0 0.0
    %262 = vmatprep.subr.mxu0 0.0
    %263 = vmatpush2.msra.mxu0 0.0
    %264 = vmatprep.subr.mxu0 0.0
    %265 = vmatpush2.msra.mxu0 0.0
    %266 = vmatprep.subr.mxu0 0.0
    %267 = vmatpush2.msra.mxu0 0.0
    %268 = vmatprep.subr.mxu0 0.0
    %269 = vmatpush2.msra.mxu0 0.0
    %270 = vmatprep.subr.mxu0 0.0
    %271 = vmatpush2.msra.mxu0 0.0
    %272 = vmatprep.subr.mxu0 0.0
    %273 = vmatpush2.msra.mxu0 0.0
    %274 = vmatprep.subr.mxu0 0.0
    %275 = vmatpush2.msra.mxu0 0.0
    %276 = vmatprep.subr.mxu0 0.0
    %277 = vmatpush2.msra.mxu0 0.0
    %278 = vmatprep.subr.mxu0 0.0
    %279 = vmatpush2.msra.mxu0 0.0
    %280 = vmatprep.subr.mxu0 0.0
    %281 = vmatpush2.msra.mxu0 0.0
    %282 = vmatprep.mubr.f32.mxu0 0.0
    %283 = vmatmul.mubr.f32.gmra.mxu0 %v193
    %v284 = vpop.f32.mrf.mxu0
    %v285 = vadd.f32 %v216, %v284
    %v286 = vpop.f32.mrf.mxu0
    %287 = vmatprep.mubr.f32.mxu0 0.0
    %288 = vmatmul.mubr.f32.gmra.mxu0 %v194
    %v289 = vpop.f32.mrf.mxu0
    %v290 = vadd.f32 %v216, %v289
    %v291 = vpop.f32.mrf.mxu0
    %292 = vdwg.mxu0
    %v293 = vmax.f32 %v285, 0.0
    %v294 = vmax.f32 %v290, 0.0
    %v295 = vld [vmem:[#allocation6] sm:$0xff]
    %v296 = vld [vmem:[#allocation6 + $0x8] sm:$0xff]
    %v297 = vld [vmem:[#allocation6 + $0x10] sm:$0xff]
    %v298 = vld [vmem:[#allocation6 + $0x18] sm:$0xff]
    %v299 = vld [vmem:[#allocation6 + $0x20] sm:$0xff]
    %v300 = vld [vmem:[#allocation6 + $0x28] sm:$0xff]
    %v301 = vld [vmem:[#allocation6 + $0x30] sm:$0xff]
    %v302 = vld [vmem:[#allocation6 + $0x38] sm:$0xff]
    %v303 = vld [vmem:[#allocation6 + $0x40] sm:$0xff]
    %v304 = vld [vmem:[#allocation6 + $0x48] sm:$0xff]
    %v305 = vld [vmem:[#allocation6 + $0x50] sm:$0xff]
    %v306 = vld [vmem:[#allocation6 + $0x58] sm:$0xff]
    %v307 = vld [vmem:[#allocation6 + $0x60] sm:$0xff]
    %v308 = vld [vmem:[#allocation6 + $0x68] sm:$0xff]
    %v309 = vld [vmem:[#allocation6 + $0x70] sm:$0xff]
    %v310 = vld [vmem:[#allocation6 + $0x78] sm:$0xff]
    %v311 = vld [vmem:[%s6] sm:$0x1]
    %v313 = vlaneseq
    %v314 = vshrl.u32 %v313, 7
    %v315 = vsub.s32 0, %v314
    %v316 = vrot.slane %v311, %v315
    %318 = vmatprep.subr.mxu0 0.0
    %319 = vmatpush1.msra.mxu0 %v310
    %320 = vmatprep.subr.mxu0 0.0
    %321 = vmatpush1.msra.mxu0 %v309
    %322 = vmatprep.subr.mxu0 0.0
    %323 = vmatpush1.msra.mxu0 %v308
    %324 = vmatprep.subr.mxu0 0.0
    %325 = vmatpush1.msra.mxu0 %v307
    %326 = vmatprep.subr.mxu0 0.0
    %327 = vmatpush1.msra.mxu0 %v306
    %328 = vmatprep.subr.mxu0 0.0
    %329 = vmatpush1.msra.mxu0 %v305
    %330 = vmatprep.subr.mxu0 0.0
    %331 = vmatpush1.msra.mxu0 %v304
    %332 = vmatprep.subr.mxu0 0.0
    %333 = vmatpush1.msra.mxu0 %v303
    %334 = vmatprep.subr.mxu0 0.0
    %335 = vmatpush1.msra.mxu0 %v302
    %336 = vmatprep.subr.mxu0 0.0
    %337 = vmatpush1.msra.mxu0 %v301
    %338 = vmatprep.subr.mxu0 0.0
    %339 = vmatpush1.msra.mxu0 %v300
    %340 = vmatprep.subr.mxu0 0.0
    %341 = vmatpush1.msra.mxu0 %v299
    %342 = vmatprep.subr.mxu0 0.0
    %343 = vmatpush1.msra.mxu0 %v298
    %344 = vmatprep.subr.mxu0 0.0
    %345 = vmatpush1.msra.mxu0 %v297
    %346 = vmatprep.subr.mxu0 0.0
    %347 = vmatpush1.msra.mxu0 %v296
    %348 = vmatprep.subr.mxu0 0.0
    %349 = vmatpush1.msra.mxu0 %v295
    %350 = vmatprep.subr.mxu0 0.0
    %351 = vmatpush2.msra.mxu0 0.0
    %352 = vmatprep.subr.mxu0 0.0
    %353 = vmatpush2.msra.mxu0 0.0
    %354 = vmatprep.subr.mxu0 0.0
    %355 = vmatpush2.msra.mxu0 0.0
    %356 = vmatprep.subr.mxu0 0.0
    %357 = vmatpush2.msra.mxu0 0.0
    %358 = vmatprep.subr.mxu0 0.0
    %359 = vmatpush2.msra.mxu0 0.0
    %360 = vmatprep.subr.mxu0 0.0
    %361 = vmatpush2.msra.mxu0 0.0
    %362 = vmatprep.subr.mxu0 0.0
    %363 = vmatpush2.msra.mxu0 0.0
    %364 = vmatprep.subr.mxu0 0.0
    %365 = vmatpush2.msra.mxu0 0.0
    %366 = vmatprep.subr.mxu0 0.0
    %367 = vmatpush2.msra.mxu0 0.0
    %368 = vmatprep.subr.mxu0 0.0
    %369 = vmatpush2.msra.mxu0 0.0
    %370 = vmatprep.subr.mxu0 0.0
    %371 = vmatpush2.msra.mxu0 0.0
    %372 = vmatprep.subr.mxu0 0.0
    %373 = vmatpush2.msra.mxu0 0.0
    %374 = vmatprep.subr.mxu0 0.0
    %375 = vmatpush2.msra.mxu0 0.0
    %376 = vmatprep.subr.mxu0 0.0
    %377 = vmatpush2.msra.mxu0 0.0
    %378 = vmatprep.subr.mxu0 0.0
    %379 = vmatpush2.msra.mxu0 0.0
    %380 = vmatprep.subr.mxu0 0.0
    %381 = vmatpush2.msra.mxu0 0.0
    %382 = vmatprep.mubr.f32.mxu0 0.0
    %383 = vmatmul.mubr.f32.gmra.mxu0 %v293
    %v384 = vpop.f32.mrf.mxu0
    %v385 = vadd.f32 %v316, %v384
    %v386 = vpop.f32.mrf.mxu0
    %387 = vmatprep.mubr.f32.mxu0 0.0
    %388 = vmatmul.mubr.f32.gmra.mxu0 %v294
    %v389 = vpop.f32.mrf.mxu0
    %v390 = vadd.f32 %v316, %v389
    %v391 = vpop.f32.mrf.mxu0
    %392 = vdwg.mxu0
    %v393 = vmax.f32 %v385, 0.0
    %v394 = vmax.f32 %v390, 0.0
    %v395 = vld [vmem:[#allocation7] sm:$0xff]
    %v396 = vld [vmem:[#allocation7 + $0x8] sm:$0xff]
    %v397 = vld [vmem:[#allocation7 + $0x10] sm:$0xff]
    %v398 = vld [vmem:[#allocation7 + $0x18] sm:$0xff]
    %v399 = vld [vmem:[#allocation7 + $0x20] sm:$0xff]
    %v400 = vld [vmem:[#allocation7 + $0x28] sm:$0xff]
    %v401 = vld [vmem:[#allocation7 + $0x30] sm:$0xff]
    %v402 = vld [vmem:[#allocation7 + $0x38] sm:$0xff]
    %v403 = vld [vmem:[#allocation7 + $0x40] sm:$0xff]
    %v404 = vld [vmem:[#allocation7 + $0x48] sm:$0xff]
    %v405 = vld [vmem:[#allocation7 + $0x50] sm:$0xff]
    %v406 = vld [vmem:[#allocation7 + $0x58] sm:$0xff]
    %v407 = vld [vmem:[#allocation7 + $0x60] sm:$0xff]
    %v408 = vld [vmem:[#allocation7 + $0x68] sm:$0xff]
    %v409 = vld [vmem:[#allocation7 + $0x70] sm:$0xff]
    %v410 = vld [vmem:[#allocation7 + $0x78] sm:$0xff]
    %v411 = vld [vmem:[%s8] sm:$0x1]
    %v413 = vlaneseq
    %v414 = vshrl.u32 %v413, 7
    %v415 = vsub.s32 0, %v414
    %v416 = vrot.slane %v411, %v415
    %418 = vmatprep.subr.mxu0 0.0
    %419 = vmatpush1.msra.mxu0 %v410
    %420 = vmatprep.subr.mxu0 0.0
    %421 = vmatpush1.msra.mxu0 %v409
    %422 = vmatprep.subr.mxu0 0.0
    %423 = vmatpush1.msra.mxu0 %v408
    %424 = vmatprep.subr.mxu0 0.0
    %425 = vmatpush1.msra.mxu0 %v407
    %426 = vmatprep.subr.mxu0 0.0
    %427 = vmatpush1.msra.mxu0 %v406
    %428 = vmatprep.subr.mxu0 0.0
    %429 = vmatpush1.msra.mxu0 %v405
    %430 = vmatprep.subr.mxu0 0.0
    %431 = vmatpush1.msra.mxu0 %v404
    %432 = vmatprep.subr.mxu0 0.0
    %433 = vmatpush1.msra.mxu0 %v403
    %434 = vmatprep.subr.mxu0 0.0
    %435 = vmatpush1.msra.mxu0 %v402
    %436 = vmatprep.subr.mxu0 0.0
    %437 = vmatpush1.msra.mxu0 %v401
    %438 = vmatprep.subr.mxu0 0.0
    %439 = vmatpush1.msra.mxu0 %v400
    %440 = vmatprep.subr.mxu0 0.0
    %441 = vmatpush1.msra.mxu0 %v399
    %442 = vmatprep.subr.mxu0 0.0
    %443 = vmatpush1.msra.mxu0 %v398
    %444 = vmatprep.subr.mxu0 0.0
    %445 = vmatpush1.msra.mxu0 %v397
    %446 = vmatprep.subr.mxu0 0.0
    %447 = vmatpush1.msra.mxu0 %v396
    %448 = vmatprep.subr.mxu0 0.0
    %449 = vmatpush1.msra.mxu0 %v395
    %450 = vmatprep.subr.mxu0 0.0
    %451 = vmatpush2.msra.mxu0 0.0
    %452 = vmatprep.subr.mxu0 0.0
    %453 = vmatpush2.msra.mxu0 0.0
    %454 = vmatprep.subr.mxu0 0.0
    %455 = vmatpush2.msra.mxu0 0.0
    %456 = vmatprep.subr.mxu0 0.0
    %457 = vmatpush2.msra.mxu0 0.0
    %458 = vmatprep.subr.mxu0 0.0
    %459 = vmatpush2.msra.mxu0 0.0
    %460 = vmatprep.subr.mxu0 0.0
    %461 = vmatpush2.msra.mxu0 0.0
    %462 = vmatprep.subr.mxu0 0.0
    %463 = vmatpush2.msra.mxu0 0.0
    %464 = vmatprep.subr.mxu0 0.0
    %465 = vmatpush2.msra.mxu0 0.0
    %466 = vmatprep.subr.mxu0 0.0
    %467 = vmatpush2.msra.mxu0 0.0
    %468 = vmatprep.subr.mxu0 0.0
    %469 = vmatpush2.msra.mxu0 0.0
    %470 = vmatprep.subr.mxu0 0.0
    %471 = vmatpush2.msra.mxu0 0.0
    %472 = vmatprep.subr.mxu0 0.0
    %473 = vmatpush2.msra.mxu0 0.0
    %474 = vmatprep.subr.mxu0 0.0
    %475 = vmatpush2.msra.mxu0 0.0
    %476 = vmatprep.subr.mxu0 0.0
    %477 = vmatpush2.msra.mxu0 0.0
    %478 = vmatprep.subr.mxu0 0.0
    %479 = vmatpush2.msra.mxu0 0.0
    %480 = vmatprep.subr.mxu0 0.0
    %481 = vmatpush2.msra.mxu0 0.0
    %482 = vmatprep.mubr.f32.mxu0 0.0
    %483 = vmatmul.mubr.f32.gmra.mxu0 %v393
    %v484 = vpop.f32.mrf.mxu0
    %v485 = vadd.f32 %v416, %v484
    %v486 = vpop.f32.mrf.mxu0
    %487 = vmatprep.mubr.f32.mxu0 0.0
    %488 = vmatmul.mubr.f32.gmra.mxu0 %v394
    %v489 = vpop.f32.mrf.mxu0
    %v490 = vadd.f32 %v416, %v489
    %v491 = vpop.f32.mrf.mxu0
    %492 = vdwg.mxu0
    %493 = vst [vmem:[%s9] sm:$0xff] %v485
    %494 = vst [vmem:[%s9 + $0x8] sm:$0xff] %v490
    // Predicated region
    $region54: #{gn_tree_forward.1} parent=1 // pred_check
      _
    $region55: #{gn_tree_forward.1} parent=1 // pred_check_branch
      %496 = sbr.rel (0) target = $region57
    $region56: #{gn_tree_forward.1} parent=1 // pred_region
      _
    $region57: #{gn_tree_forward.1} parent=1 // pred_fallthru
      _
    // Predicated region
    $region58: #{gn_tree_forward.1} parent=1 // pred_check
      _
    $region59: #{gn_tree_forward.1} parent=1 // pred_check_branch
      %498 = sbr.rel (0) target = $region61
    $region60: #{gn_tree_forward.1} parent=1 // pred_region
      _
    $region61: #{gn_tree_forward.1} parent=1 // pred_fallthru
      _
    %499 = vsyncpa [#allocation3], 1
    %500 = vsyncpa [#allocation5], 1
    %501 = vsyncpa [#allocation8], 1

</llo_original>
